<compile_context>
chip_gen: v6e
topology: v6e:2x2x1
jax: 0.10.0
libtpu: 0.0.40
codegen_flags: <defaults>
</compile_context>

<pallas_src>
import jax
import jax.numpy as jnp
from jax import lax
from jax.experimental import pallas as pl
from jax.experimental.pallas import tpu as pltpu


_SMALL_C_MAX = 16  # channel contraction done with unrolled VPU FMAs up to this many channels


def _vmem_budgets():
    """Generation-aware scoped-VMEM limit and resident-tile budget (128 MiB v5e/v6e, 64 MiB v7x)."""
    try:
        cap = int(pltpu.get_tpu_info().vmem_capacity_bytes)
    except Exception:
        cap = 64 * 1024 * 1024  # conservative fallback (v7x-sized)
    limit = min((cap * 3) // 4, 96 * 1024 * 1024)  # leave headroom for compiler scratch
    tile_budget = limit // 3                       # pipelined x/out buffers + f32 intermediates
    return int(limit), int(tile_budget)


_VMEM_LIMIT_BYTES, _TILE_BUDGET_BYTES = _vmem_budgets()


def _pick_tiles(n, c, hw, itemsize, tile_budget, small_c):
    """Choose (Nb, hw_tile, n_hw_blocks): payload-sized grid steps, no wrapper padding."""
    # pass-2 per-lane, per-image cost: x + out blocks double-buffered (input dtype)
    # plus ~12 B of single-buffered f32 intermediates (conv / attn); pass 1 is strictly lighter.
    per_lane = 4 * c * itemsize + 12
    max_lanes = max(128, tile_budget // per_lane)
    if hw <= max_lanes:
        hw_tile = hw                       # single full-width block (no partial hw blocks)
    else:
        hw_tile = (max_lanes // 128) * 128  # lane-dense, trailing partial block handled by masking
    n_hw = -(-hw // hw_tile)

    # Group images per step (small-C path only) so each grid step moves a decent payload.
    # Nb must divide N so no batch masking is needed.
    nb = 1
    if small_c:
        for d in range(n, 0, -1):
            if n % d == 0 and d * hw_tile * per_lane <= tile_budget:
                nb = d
                break
    return nb, hw_tile, n_hw


def _conv_from_tile(x, w_ref, c):
    """1x1 conv on a resident tile via unrolled scalar FMAs: (Nb, C, hw) -> (Nb, 1, hw) f32."""
    acc = x[:, 0:1, :].astype(jnp.float32) * w_ref[0]
    for ch in range(1, c):
        acc = acc + x[:, ch:ch + 1, :].astype(jnp.float32) * w_ref[ch]
    return acc


# ---------------------------------------------------------------------------------------------
# small-C path (VPU FMA contraction, weights in SMEM)
# ---------------------------------------------------------------------------------------------
def _make_stats_kernel_fma(c, hw_tile, hw_total, need_mask):
    def kernel(x_ref, w_ref, sum_ref, ssq_ref):
        # x_ref: (Nb, C, hw_tile) input dtype; w_ref: (C,) f32 SMEM
        # sum_ref / ssq_ref: (1, 1, hw_tile) f32 lane accumulators, resident across t
        t = pl.program_id(1)

        @pl.when(t == 0)
        def _():
            sum_ref[...] = jnp.zeros_like(sum_ref)
            ssq_ref[...] = jnp.zeros_like(ssq_ref)

        conv = _conv_from_tile(x_ref[...], w_ref, c)                # (Nb, 1, hw_tile) f32
        if need_mask:  # ragged trailing hw block: drop garbage lanes >= HW from the stats
            lane = lax.broadcasted_iota(jnp.int32, conv.shape, 2)
            conv = jnp.where(t * hw_tile + lane < hw_total, conv, 0.0)

        sum_ref[...] += jnp.sum(conv, axis=0, keepdims=True)
        ssq_ref[...] += jnp.sum(conv * conv, axis=0, keepdims=True)

    return kernel


def _make_apply_kernel_fma(c):
    def kernel(x_ref, w_ref, scalars_ref, o_ref):
        # x_ref / o_ref: (Nb, C, hw_tile) input dtype; w_ref: (C,) f32 SMEM; scalars: (2,) f32 SMEM
        x = x_ref[...]
        conv = _conv_from_tile(x, w_ref, c)                         # (Nb, 1, hw_tile) f32
        attn = jnp.maximum(conv * scalars_ref[0] + scalars_ref[1], 0.0)
        o_ref[...] = x * attn.astype(o_ref.dtype)

    return kernel


# ---------------------------------------------------------------------------------------------
# large-C path (MXU dot, weights as a (1, C) VMEM row in the *input* dtype -> no f32 tile cast)
# ---------------------------------------------------------------------------------------------
def _make_stats_kernel_mxu(hw_tile, hw_total, need_mask):
    def kernel(x_ref, w_ref, sum_ref, ssq_ref):
        t = pl.program_id(1)

        @pl.when(t == 0)
        def _():
            sum_ref[...] = jnp.zeros_like(sum_ref)
            ssq_ref[...] = jnp.zeros_like(ssq_ref)

        conv = jnp.dot(w_ref[...], x_ref[0], preferred_element_type=jnp.float32)  # (1, hw_tile)
        if need_mask:
            lane = lax.broadcasted_iota(jnp.int32, conv.shape, 1)
            conv = jnp.where(t * hw_tile + lane < hw_total, conv, 0.0)

        sum_ref[0] += conv
        ssq_ref[0] += conv * conv

    return kernel


def _apply_kernel_mxu(x_ref, w_ref, scalars_ref, o_ref):
    conv = jnp.dot(w_ref[...], x_ref[0], preferred_element_type=jnp.float32)       # (1, hw_tile)
    attn = jnp.maximum(conv * scalars_ref[0] + scalars_ref[1], 0.0)
    o_ref[...] = x_ref[...] * attn[None].astype(o_ref.dtype)


# ---------------------------------------------------------------------------------------------
@jax.jit
def spatial_attention_module(x_nchw, conv_w, conv_b, bn_gamma, bn_beta, bn_eps=1e-5):
    """x_nchw: (N, C, H, W). conv_w: (1, C, 1, 1). conv_b: (1,) (cancelled by train-mode BN)."""
    del conv_b  # mathematically cancelled by the BN mean subtraction (see module docstring)
    N, C, H, W = x_nchw.shape
    HW = H * W
    x_r = x_nchw.reshape(N, C, HW)          # free reshape, no padding / copies

    small_c = C <= _SMALL_C_MAX
    nb, hw_tile, n_hw = _pick_tiles(N, C, HW, x_nchw.dtype.itemsize, _TILE_BUDGET_BYTES, small_c)
    n_b = N // nb
    need_mask = (HW % hw_tile) != 0

    if small_c:
        w_arg = conv_w.reshape(C).astype(jnp.float32)              # scalars in SMEM
        w_spec = pl.BlockSpec(memory_space=pltpu.MemorySpace.SMEM)
        stats_kernel = _make_stats_kernel_fma(C, hw_tile, HW, need_mask)
        apply_kernel = _make_apply_kernel_fma(C)
    else:
        w_arg = conv_w.reshape(1, C).astype(x_nchw.dtype)          # native-dtype MXU operand
        w_spec = pl.BlockSpec((1, C), lambda n, t: (0, 0))
        stats_kernel = _make_stats_kernel_mxu(hw_tile, HW, need_mask)
        apply_kernel = _apply_kernel_mxu

    # ---- pass 1: lane-wise conv-sum / conv-sum-of-squares partials -------------------------
    lane_sum, lane_ssq = pl.pallas_call(
        stats_kernel,
        out_shape=(
            jax.ShapeDtypeStruct((n_b, 1, hw_tile), jnp.float32),
            jax.ShapeDtypeStruct((n_b, 1, hw_tile), jnp.float32),
        ),
        grid=(n_b, n_hw),
        in_specs=[
            pl.BlockSpec((nb, C, hw_tile), lambda n, t: (n, 0, t)),
            w_spec,
        ],
        out_specs=(
            pl.BlockSpec((1, 1, hw_tile), lambda n, t: (n, 0, 0)),   # accumulator over t
            pl.BlockSpec((1, 1, hw_tile), lambda n, t: (n, 0, 0)),   # accumulator over t
        ),
        compiler_params=pltpu.CompilerParams(
            dimension_semantics=("parallel", "arbitrary"),
            vmem_limit_bytes=_VMEM_LIMIT_BYTES,
        ),
    )(x_r, w_arg)

    # ---- tiny glue: fold train-mode BN (biased batch stats over N,H,W) into scale/shift ----
    m = N * HW
    total = jnp.sum(lane_sum)
    total_sq = jnp.sum(lane_ssq)
    mean = total / m
    var = jnp.maximum(total_sq / m - mean * mean, 0.0)
    scale = bn_gamma * lax.rsqrt(var + bn_eps)
    shift = bn_beta - mean * scale
    scalars = jnp.stack([scale, shift]).astype(jnp.float32)

    # ---- pass 2: recompute conv on the resident tile and apply attention (pure stream) -----
    out = pl.pallas_call(
        apply_kernel,
        out_shape=jax.ShapeDtypeStruct((N, C, HW), x_nchw.dtype),
        grid=(n_b, n_hw),
        in_specs=[
            pl.BlockSpec((nb, C, hw_tile), lambda n, t: (n, 0, t)),
            w_spec,
            pl.BlockSpec(memory_space=pltpu.MemorySpace.SMEM),
        ],
        out_specs=pl.BlockSpec((nb, C, hw_tile), lambda n, t: (n, 0, t)),
        compiler_params=pltpu.CompilerParams(
            dimension_semantics=("parallel", "parallel"),
            vmem_limit_bytes=_VMEM_LIMIT_BYTES,
        ),
    )(x_r, w_arg, scalars)

    return out.reshape(N, C, H, W)


def _reference(x, conv_w, conv_b, gamma, beta, eps=1e-5):
    # Plain-JAX reference of the same forward (training-mode BN, biased variance, with bias).
    N, C, H, W = x.shape
    conv = jnp.einsum("nchw,c->nhw", x, conv_w.reshape(C)) + conv_b.reshape(())
    mean = jnp.mean(conv)
    var = jnp.mean((conv - mean) ** 2)
    attn = jnp.maximum((conv - mean) / jnp.sqrt(var + eps) * gamma + beta, 0.0)
    return x * attn[:, None, :, :]


if __name__ == "__main__":
    key = jax.random.PRNGKey(0)
    kx, kw, kb = jax.random.split(key, 3)

    N, C, H, W = 2, 4, 16, 16
    x = jax.random.normal(kx, (N, C, H, W), dtype=jnp.float32)

    # Deterministic synthetic parameters (Conv2d(C, 1, 1) weight/bias; fresh BN: gamma=1, beta=0).
    conv_w = jax.random.normal(kw, (1, C, 1, 1), dtype=jnp.float32) * 0.5
    conv_b = jax.random.normal(kb, (1,), dtype=jnp.float32) * 0.1
    bn_gamma = jnp.float32(1.0)
    bn_beta = jnp.float32(0.0)

    out = spatial_attention_module(x, conv_w, conv_b, bn_gamma, bn_beta)
    out = jax.block_until_ready(out)

    ref = _reference(x, conv_w, conv_b, bn_gamma, bn_beta)
    assert out.shape == (N, C, H, W)
    assert jnp.allclose(out, ref, rtol=1e-5, atol=1e-5), "mismatch vs reference"

    print("KERNEL_OK")
</pallas_src>

<mosaic_0001>
module attributes {stable_mosaic.version = 11 : i64} {
  func.func @kernel(%arg0: i32, %arg1: i32, %arg2: memref<2x4x256xf32, #tpu.memory_space<vmem>>, %arg3: memref<4xf32, #tpu.memory_space<smem>>, %arg4: memref<1x1x256xf32, #tpu.memory_space<vmem>>, %arg5: memref<1x1x256xf32, #tpu.memory_space<vmem>>) attributes {dimension_semantics = [#tpu.dimension_semantics<parallel>, #tpu.dimension_semantics<arbitrary>], iteration_bounds = array<i64: 1, 1>, scalar_prefetch = 0 : i64, scratch_operands = 0 : i64, tpu.core_type = #tpu.core_type<tc>, window_params = [{transform_indices = @transform_0, window_bounds = array<i64: 2, 4, 256>}, {transform_indices = @transform_1, window_bounds = array<i64: 4>}, {transform_indices = @transform_2, window_bounds = array<i64: 1, 1, 256>}, {transform_indices = @transform_3, window_bounds = array<i64: 1, 1, 256>}]} {
    %c0_i32 = arith.constant 0 : i32
    %0 = arith.cmpi eq, %arg1, %c0_i32 : i32
    %1 = arith.extui %0 : i1 to i32
    %c0_i32_0 = arith.constant 0 : i32
    %2 = arith.cmpi ne, %1, %c0_i32_0 : i32
    scf.if %2 {
      %cst_17 = arith.constant 0.000000e+00 : f32
      %34 = vector.broadcast %cst_17 : f32 to vector<1x1x256xf32>
      %c0_18 = arith.constant 0 : index
      %c0_19 = arith.constant 0 : index
      %c0_20 = arith.constant 0 : index
      %35 = vector.load %arg4[%c0_18, %c0_19, %c0_20] : memref<1x1x256xf32, #tpu.memory_space<vmem>>, vector<1x1x256xf32>
      tpu.vector_store %arg4[%c0_18, %c0_19, %c0_20], %34 {strides = array<i32>} : memref<1x1x256xf32, #tpu.memory_space<vmem>>, vector<1x1x256xf32>,
      %cst_21 = arith.constant 0.000000e+00 : f32
      %36 = vector.broadcast %cst_21 : f32 to vector<1x1x256xf32>
      %c0_22 = arith.constant 0 : index
      %c0_23 = arith.constant 0 : index
      %c0_24 = arith.constant 0 : index
      %37 = vector.load %arg5[%c0_22, %c0_23, %c0_24] : memref<1x1x256xf32, #tpu.memory_space<vmem>>, vector<1x1x256xf32>
      tpu.vector_store %arg5[%c0_22, %c0_23, %c0_24], %36 {strides = array<i32>} : memref<1x1x256xf32, #tpu.memory_space<vmem>>, vector<1x1x256xf32>,
    } else {
    }
    %c0 = arith.constant 0 : index
    %c0_1 = arith.constant 0 : index
    %c0_2 = arith.constant 0 : index
    %3 = vector.load %arg2[%c0, %c0_1, %c0_2] : memref<2x4x256xf32, #tpu.memory_space<vmem>>, vector<2x4x256xf32>
    %4 = vector.extract_strided_slice %3 {offsets = [0, 0, 0], sizes = [2, 1, 256], strides = [1, 1, 1]} : vector<2x4x256xf32> to vector<2x1x256xf32>
    %c0_3 = arith.constant 0 : index
    %5 = memref.load %arg3[%c0_3] : memref<4xf32, #tpu.memory_space<smem>>
    %6 = vector.broadcast %5 : f32 to vector<2x1x256xf32>
    %7 = arith.mulf %4, %6 : vector<2x1x256xf32>
    %8 = vector.extract_strided_slice %3 {offsets = [0, 1, 0], sizes = [2, 1, 256], strides = [1, 1, 1]} : vector<2x4x256xf32> to vector<2x1x256xf32>
    %c1 = arith.constant 1 : index
    %9 = memref.load %arg3[%c1] : memref<4xf32, #tpu.memory_space<smem>>
    %10 = vector.broadcast %9 : f32 to vector<2x1x256xf32>
    %11 = arith.mulf %8, %10 : vector<2x1x256xf32>
    %12 = arith.addf %7, %11 : vector<2x1x256xf32>
    %13 = vector.extract_strided_slice %3 {offsets = [0, 2, 0], sizes = [2, 1, 256], strides = [1, 1, 1]} : vector<2x4x256xf32> to vector<2x1x256xf32>
    %c2 = arith.constant 2 : index
    %14 = memref.load %arg3[%c2] : memref<4xf32, #tpu.memory_space<smem>>
    %15 = vector.broadcast %14 : f32 to vector<2x1x256xf32>
    %16 = arith.mulf %13, %15 : vector<2x1x256xf32>
    %17 = arith.addf %12, %16 : vector<2x1x256xf32>
    %18 = vector.extract_strided_slice %3 {offsets = [0, 3, 0], sizes = [2, 1, 256], strides = [1, 1, 1]} : vector<2x4x256xf32> to vector<2x1x256xf32>
    %c3 = arith.constant 3 : index
    %19 = memref.load %arg3[%c3] : memref<4xf32, #tpu.memory_space<smem>>
    %20 = vector.broadcast %19 : f32 to vector<2x1x256xf32>
    %21 = arith.mulf %18, %20 : vector<2x1x256xf32>
    %22 = arith.addf %17, %21 : vector<2x1x256xf32>
    %c0_4 = arith.constant 0 : index
    %c0_5 = arith.constant 0 : index
    %c0_6 = arith.constant 0 : index
    %23 = vector.load %arg4[%c0_4, %c0_5, %c0_6] : memref<1x1x256xf32, #tpu.memory_space<vmem>>, vector<1x1x256xf32>
    %cst = arith.constant dense<0.000000e+00> : vector<1x256xf32>
    %24 = vector.multi_reduction <add>, %22, %cst [0] : vector<2x1x256xf32> to vector<1x256xf32>
    %25 = vector.shape_cast %24 : vector<1x256xf32> to vector<1x1x256xf32>
    %26 = arith.addf %23, %25 : vector<1x1x256xf32>
    %c0_7 = arith.constant 0 : index
    %c0_8 = arith.constant 0 : index
    %c0_9 = arith.constant 0 : index
    %27 = vector.load %arg4[%c0_7, %c0_8, %c0_9] : memref<1x1x256xf32, #tpu.memory_space<vmem>>, vector<1x1x256xf32>
    tpu.vector_store %arg4[%c0_7, %c0_8, %c0_9], %26 {strides = array<i32>} : memref<1x1x256xf32, #tpu.memory_space<vmem>>, vector<1x1x256xf32>,
    %c0_10 = arith.constant 0 : index
    %c0_11 = arith.constant 0 : index
    %c0_12 = arith.constant 0 : index
    %28 = vector.load %arg5[%c0_10, %c0_11, %c0_12] : memref<1x1x256xf32, #tpu.memory_space<vmem>>, vector<1x1x256xf32>
    %29 = arith.mulf %22, %22 : vector<2x1x256xf32>
    %cst_13 = arith.constant dense<0.000000e+00> : vector<1x256xf32>
    %30 = vector.multi_reduction <add>, %29, %cst_13 [0] : vector<2x1x256xf32> to vector<1x256xf32>
    %31 = vector.shape_cast %30 : vector<1x256xf32> to vector<1x1x256xf32>
    %32 = arith.addf %28, %31 : vector<1x1x256xf32>
    %c0_14 = arith.constant 0 : index
    %c0_15 = arith.constant 0 : index
    %c0_16 = arith.constant 0 : index
    %33 = vector.load %arg5[%c0_14, %c0_15, %c0_16] : memref<1x1x256xf32, #tpu.memory_space<vmem>>, vector<1x1x256xf32>
    tpu.vector_store %arg5[%c0_14, %c0_15, %c0_16], %32 {strides = array<i32>} : memref<1x1x256xf32, #tpu.memory_space<vmem>>, vector<1x1x256xf32>,
    return
  }
  func.func @transform_0(%arg0: i32, %arg1: i32) -> (i32, i32, i32) {
    %c0_i32 = arith.constant 0 : i32
    %c0_i32_0 = arith.constant 0 : i32
    return %arg0, %c0_i32, %arg1 : i32, i32, i32
  }
  func.func @transform_1(%arg0: i32, %arg1: i32) -> i32 {
    %c0_i32 = arith.constant 0 : i32
    %c0_i32_0 = arith.constant 0 : i32
    return %c0_i32 : i32
  }
  func.func @transform_2(%arg0: i32, %arg1: i32) -> (i32, i32, i32) {
    %c0_i32 = arith.constant 0 : i32
    %c0_i32_0 = arith.constant 0 : i32
    %c0_i32_1 = arith.constant 0 : i32
    return %arg0, %c0_i32, %c0_i32_0 : i32, i32, i32
  }
  func.func @transform_3(%arg0: i32, %arg1: i32) -> (i32, i32, i32) {
    %c0_i32 = arith.constant 0 : i32
    %c0_i32_0 = arith.constant 0 : i32
    %c0_i32_1 = arith.constant 0 : i32
    return %arg0, %c0_i32, %c0_i32_0 : i32, i32, i32
  }
}

module attributes {stable_mosaic.version = 11 : i64} {
  func.func @kernel(%arg0: i32, %arg1: i32, %arg2: memref<2x4x256xf32, #tpu.memory_space<vmem>>, %arg3: memref<4xf32, #tpu.memory_space<smem>>, %arg4: memref<2xf32, #tpu.memory_space<smem>>, %arg5: memref<2x4x256xf32, #tpu.memory_space<vmem>>) attributes {dimension_semantics = [#tpu.dimension_semantics<parallel>, #tpu.dimension_semantics<parallel>], iteration_bounds = array<i64: 1, 1>, scalar_prefetch = 0 : i64, scratch_operands = 0 : i64, tpu.core_type = #tpu.core_type<tc>, window_params = [{transform_indices = @transform_0, window_bounds = array<i64: 2, 4, 256>}, {transform_indices = @transform_1, window_bounds = array<i64: 4>}, {transform_indices = @transform_2, window_bounds = array<i64: 2>}, {transform_indices = @transform_3, window_bounds = array<i64: 2, 4, 256>}]} {
    %c0 = arith.constant 0 : index
    %c0_0 = arith.constant 0 : index
    %c0_1 = arith.constant 0 : index
    %0 = vector.load %arg2[%c0, %c0_0, %c0_1] : memref<2x4x256xf32, #tpu.memory_space<vmem>>, vector<2x4x256xf32>
    %1 = vector.extract_strided_slice %0 {offsets = [0, 0, 0], sizes = [2, 1, 256], strides = [1, 1, 1]} : vector<2x4x256xf32> to vector<2x1x256xf32>
    %c0_2 = arith.constant 0 : index
    %2 = memref.load %arg3[%c0_2] : memref<4xf32, #tpu.memory_space<smem>>
    %3 = vector.broadcast %2 : f32 to vector<2x1x256xf32>
    %4 = arith.mulf %1, %3 : vector<2x1x256xf32>
    %5 = vector.extract_strided_slice %0 {offsets = [0, 1, 0], sizes = [2, 1, 256], strides = [1, 1, 1]} : vector<2x4x256xf32> to vector<2x1x256xf32>
    %c1 = arith.constant 1 : index
    %6 = memref.load %arg3[%c1] : memref<4xf32, #tpu.memory_space<smem>>
    %7 = vector.broadcast %6 : f32 to vector<2x1x256xf32>
    %8 = arith.mulf %5, %7 : vector<2x1x256xf32>
    %9 = arith.addf %4, %8 : vector<2x1x256xf32>
    %10 = vector.extract_strided_slice %0 {offsets = [0, 2, 0], sizes = [2, 1, 256], strides = [1, 1, 1]} : vector<2x4x256xf32> to vector<2x1x256xf32>
    %c2 = arith.constant 2 : index
    %11 = memref.load %arg3[%c2] : memref<4xf32, #tpu.memory_space<smem>>
    %12 = vector.broadcast %11 : f32 to vector<2x1x256xf32>
    %13 = arith.mulf %10, %12 : vector<2x1x256xf32>
    %14 = arith.addf %9, %13 : vector<2x1x256xf32>
    %15 = vector.extract_strided_slice %0 {offsets = [0, 3, 0], sizes = [2, 1, 256], strides = [1, 1, 1]} : vector<2x4x256xf32> to vector<2x1x256xf32>
    %c3 = arith.constant 3 : index
    %16 = memref.load %arg3[%c3] : memref<4xf32, #tpu.memory_space<smem>>
    %17 = vector.broadcast %16 : f32 to vector<2x1x256xf32>
    %18 = arith.mulf %15, %17 : vector<2x1x256xf32>
    %19 = arith.addf %14, %18 : vector<2x1x256xf32>
    %c0_3 = arith.constant 0 : index
    %20 = memref.load %arg4[%c0_3] : memref<2xf32, #tpu.memory_space<smem>>
    %21 = vector.broadcast %20 : f32 to vector<2x1x256xf32>
    %22 = arith.mulf %19, %21 : vector<2x1x256xf32>
    %c1_4 = arith.constant 1 : index
    %23 = memref.load %arg4[%c1_4] : memref<2xf32, #tpu.memory_space<smem>>
    %24 = vector.broadcast %23 : f32 to vector<2x1x256xf32>
    %25 = arith.addf %22, %24 : vector<2x1x256xf32>
    %cst = arith.constant 0.000000e+00 : f32
    %26 = vector.broadcast %cst : f32 to vector<2x1x256xf32>
    %27 = arith.maximumf %25, %26 : vector<2x1x256xf32>
    %28 = vector.broadcast %27 : vector<2x1x256xf32> to vector<2x4x256xf32>
    %29 = arith.mulf %0, %28 : vector<2x4x256xf32>
    %c0_5 = arith.constant 0 : index
    %c0_6 = arith.constant 0 : index
    %c0_7 = arith.constant 0 : index
    %30 = vector.load %arg5[%c0_5, %c0_6, %c0_7] : memref<2x4x256xf32, #tpu.memory_space<vmem>>, vector<2x4x256xf32>
    tpu.vector_store %arg5[%c0_5, %c0_6, %c0_7], %29 {strides = array<i32>} : memref<2x4x256xf32, #tpu.memory_space<vmem>>, vector<2x4x256xf32>,
    return
  }
  func.func @transform_0(%arg0: i32, %arg1: i32) -> (i32, i32, i32) {
    %c0_i32 = arith.constant 0 : i32
    %c0_i32_0 = arith.constant 0 : i32
    return %arg0, %c0_i32, %arg1 : i32, i32, i32
  }
  func.func @transform_1(%arg0: i32, %arg1: i32) -> i32 {
    %c0_i32 = arith.constant 0 : i32
    %c0_i32_0 = arith.constant 0 : i32
    return %c0_i32 : i32
  }
  func.func @transform_2(%arg0: i32, %arg1: i32) -> i32 {
    %c0_i32 = arith.constant 0 : i32
    %c0_i32_0 = arith.constant 0 : i32
    return %c0_i32 : i32
  }
  func.func @transform_3(%arg0: i32, %arg1: i32) -> (i32, i32, i32) {
    %c0_i32 = arith.constant 0 : i32
    %c0_i32_0 = arith.constant 0 : i32
    return %arg0, %c0_i32, %arg1 : i32, i32, i32
  }
}

</mosaic_0001>

<llo_original>
// kernel: spatial_attention_module.3
$region0: #{spatial_attention_module.3}
  #allocation0 [shape = 'u32[]', space=smem, size = 0x4, offset = 0x4, fixed_abs, tag = 'smem constant byte address 0x4 - core index']
  #allocation1 [shape = 'u32[144,128]{1,0:T(1,128)}', space=vmem, size = 0x12000, scoped, tag = 'internal scratch']
  %s0 = inlined_call_operand.vmem [shape: f32[2,4,256], index: 0, kind: input, shape index: {}]
  %s1 = inlined_call_operand.vmem [shape: f32[4], index: 1, kind: input, shape index: {}]
  %s2 = inlined_call_operand.vmem [shape: f32[2], index: 2, kind: input, shape index: {}]
  %s3 = inlined_call_operand.vmem [shape: f32[2,4,256], index: 3, kind: output, shape index: {}]
  %s4 = sld [smem:[#allocation0]]
  $region30: #{spatial_attention_module.3} parent=0
    _
  %s6 = ssub.s32 1, %s4
  %s7 = scalar_select 0, %s6, %s4
  $region1: #{spatial_attention_module.3} parent=0
    #allocation2 [shape = 'u8[512]{0}', space=smem, size = 0x200, scoped, tag = 'input window, operand 1, single buffered']
    #allocation3 [shape = 's32[1]{0}', space=sflag, size = 0x4, scoped, tag = 'scoped memory for spatial_attention_module.3']
    #allocation4 [shape = 'u8[512]{0}', space=smem, size = 0x200, scoped, tag = 'input window, operand 2, single buffered']
    #allocation5 [shape = 's32[1]{0}', space=sflag, size = 0x4, scoped, tag = 'scoped memory for spatial_attention_module.3']
    %8 = vsyncpa [#allocation3], 0
    %9 = vsyncpa [#allocation5], 0
    // Predicated region
    $region2: #{spatial_attention_module.3} parent=1 // pred_check
      _
    $region3: #{spatial_attention_module.3} parent=1 // pred_check_branch
      %11 = sbr.rel (0) target = $region5
    $region4: #{spatial_attention_module.3} parent=1 // pred_region
      _
    $region5: #{spatial_attention_module.3} parent=1 // pred_fallthru
      _
    // Predicated region
    $region6: #{spatial_attention_module.3} parent=1 // pred_check
      _
    $region7: #{spatial_attention_module.3} parent=1 // pred_check_branch
      %13 = sbr.rel (0) target = $region9
    $region8: #{spatial_attention_module.3} parent=1 // pred_region
      %s15 = ssub.s32 16, 16
      %16 = vsyncadd [#allocation3], %s15
      %s18 = sshll.u32 %s1, 4
      %s19 = int_to_ptr.vmem [resolvable:$true] %s18
      %21 = dma.vmem_to_smem %s19, 16, [#allocation2], [#allocation3]
    $region9: #{spatial_attention_module.3} parent=1 // pred_fallthru
      _
    // Predicated region
    $region10: #{spatial_attention_module.3} parent=1 // pred_check
      _
    $region11: #{spatial_attention_module.3} parent=1 // pred_check_branch
      %23 = sbr.rel (0) target = $region13
    $region12: #{spatial_attention_module.3} parent=1 // pred_region
      %s25 = ssub.s32 16, 16
      %26 = vsyncadd [#allocation5], %s25
      %s28 = sshll.u32 %s2, 4
      %s29 = int_to_ptr.vmem [resolvable:$true] %s28
      %31 = dma.vmem_to_smem %s29, 16, [#allocation4], [#allocation5]
    $region13: #{spatial_attention_module.3} parent=1 // pred_fallthru
      _
    // Predicated region
    $region14: #{spatial_attention_module.3} parent=1 // pred_check
      _
    $region15: #{spatial_attention_module.3} parent=1 // pred_check_branch
      %33 = sbr.rel (0) target = $region17
    $region16: #{spatial_attention_module.3} parent=1 // pred_region
      %34 = dma.done [#allocation3], 16
    $region17: #{spatial_attention_module.3} parent=1 // pred_fallthru
      _
    // Predicated region
    $region18: #{spatial_attention_module.3} parent=1 // pred_check
      _
    $region19: #{spatial_attention_module.3} parent=1 // pred_check_branch
      %36 = sbr.rel (0) target = $region21
    $region20: #{spatial_attention_module.3} parent=1 // pred_region
      %37 = dma.done [#allocation5], 16
    $region21: #{spatial_attention_module.3} parent=1 // pred_fallthru
      _
    %38 = sfence
    %v39 = vld [vmem:[%s0] sm:$0xff]
    %v40 = vld [vmem:[%s0 + $0x8] sm:$0xff]
    %s41 = sld [smem:[#allocation2]]
    %v42 = vstv %s41
    %v43 = vmul.f32 %v39, %v42
    %v44 = vmul.f32 %v40, %v42
    %s45 = sld [smem:[#allocation2 + $0x1]]
    %v46 = vstv %s45
    %v47 = vmul.f32 %v39, %v46
    %v48 = vmul.f32 %v40, %v46
    %v51 = vrot.slane %v47, 5
    %v52 = vrot.slane %v51, 4
    %v53 = vrot.slane %v48, 5
    %v54 = vrot.slane %v53, 4
    %v57 = vadd.f32 %v43, %v52
    %v58 = vadd.f32 %v44, %v54
    %s59 = sld [smem:[#allocation2 + $0x2]]
    %v60 = vstv %s59
    %v61 = vmul.f32 %v39, %v60
    %v62 = vmul.f32 %v40, %v60
    %v65 = vrot.slane %v61, 6
    %v66 = vrot.slane %v65, 4
    %v67 = vrot.slane %v62, 6
    %v68 = vrot.slane %v67, 4
    %v71 = vadd.f32 %v57, %v66
    %v72 = vadd.f32 %v58, %v68
    %s73 = sld [smem:[#allocation2 + $0x3]]
    %v74 = vstv %s73
    %v75 = vmul.f32 %v39, %v74
    %v76 = vmul.f32 %v40, %v74
    %v79 = vrot.slane %v75, 7
    %v80 = vrot.slane %v79, 4
    %v81 = vrot.slane %v76, 7
    %v82 = vrot.slane %v81, 4
    %v85 = vadd.f32 %v71, %v80
    %v86 = vadd.f32 %v72, %v82
    %s87 = sld [smem:[#allocation4]]
    %v88 = vstv %s87
    %v89 = vmul.f32 %v85, %v88
    %v90 = vmul.f32 %v86, %v88
    %s91 = sld [smem:[#allocation4 + $0x1]]
    %v92 = vstv %s91
    %v93 = vadd.f32 %v89, %v92
    %v94 = vadd.f32 %v90, %v92
    %v95 = vmax.f32 %v93, 0.0
    %v96 = vmax.f32 %v94, 0.0
    %v99 = vlaneseq
    %v100 = vshrl.u32 %v99, 7
    %v101 = vsub.s32 0, %v100
    %v102 = vrot.slane %v95, %v101
    %v103 = vlaneseq
    %v104 = vshrl.u32 %v103, 7
    %v105 = vsub.s32 4, %v104
    %v106 = vrot.slane %v95, %v105
    %v107 = vlaneseq
    %v108 = vshrl.u32 %v107, 7
    %v109 = vsub.s32 0, %v108
    %v110 = vrot.slane %v96, %v109
    %v111 = vlaneseq
    %v112 = vshrl.u32 %v111, 7
    %v113 = vsub.s32 4, %v112
    %v114 = vrot.slane %v96, %v113
    %v119 = vlaneseq
    %v120 = vshrl.u32 %v119, 7
    %v121 = vsub.s32 0, %v120
    %v122 = vrot.slane %v102, %v121
    %v123 = vlaneseq
    %v124 = vshrl.u32 %v123, 7
    %v125 = vsub.s32 0, %v124
    %v126 = vrot.slane %v106, %v125
    %v127 = vlaneseq
    %v128 = vshrl.u32 %v127, 7
    %v129 = vsub.s32 0, %v128
    %v130 = vrot.slane %v110, %v129
    %v131 = vlaneseq
    %v132 = vshrl.u32 %v131, 7
    %v133 = vsub.s32 0, %v132
    %v134 = vrot.slane %v114, %v133
    %v139 = vcombine.low %v122, %v126
    %v140 = vcombine.low %v130, %v134
    %v143 = vmul.f32 %v39, %v139
    %v144 = vmul.f32 %v40, %v140
    %145 = vst [vmem:[%s3] sm:$0xff] %v143
    %146 = vst [vmem:[%s3 + $0x8] sm:$0xff] %v144
    // Predicated region
    $region22: #{spatial_attention_module.3} parent=1 // pred_check
      _
    $region23: #{spatial_attention_module.3} parent=1 // pred_check_branch
      %148 = sbr.rel (0) target = $region25
    $region24: #{spatial_attention_module.3} parent=1 // pred_region
      _
    $region25: #{spatial_attention_module.3} parent=1 // pred_fallthru
      _
    // Predicated region
    $region26: #{spatial_attention_module.3} parent=1 // pred_check
      _
    $region27: #{spatial_attention_module.3} parent=1 // pred_check_branch
      %150 = sbr.rel (0) target = $region29
    $region28: #{spatial_attention_module.3} parent=1 // pred_region
      _
    $region29: #{spatial_attention_module.3} parent=1 // pred_fallthru
      _
    %151 = vsyncpa [#allocation3], 1
    %152 = vsyncpa [#allocation5], 1

// kernel: spatial_attention_module.2
$region0: #{spatial_attention_module.2}
  #allocation0 [shape = 'u32[]', space=smem, size = 0x4, offset = 0x4, fixed_abs, tag = 'smem constant byte address 0x4 - core index']
  #allocation1 [shape = 'u32[144,128]{1,0:T(1,128)}', space=vmem, size = 0x12000, scoped, tag = 'internal scratch']
  %s0 = inlined_call_operand.vmem [shape: f32[2,4,256], index: 0, kind: input, shape index: {}]
  %s1 = inlined_call_operand.vmem [shape: f32[4], index: 1, kind: input, shape index: {}]
  %s2 = inlined_call_operand.vmem [shape: f32[1,1,256], index: 2, kind: output, shape index: {0}]
  %s3 = inlined_call_operand.vmem [shape: f32[1,1,256], index: 3, kind: output, shape index: {1}]
  %4 = xla_tuple %s2, %s3
  %s5 = sld [smem:[#allocation0]]
  $region34: #{spatial_attention_module.2} parent=0
    _
  %s7 = ssub.s32 1, %s5
  %s8 = scalar_select 0, %s7, %s5
  $region1: #{spatial_attention_module.2} parent=0
    #allocation2 [shape = 'u8[512]{0}', space=smem, size = 0x200, scoped, tag = 'input window, operand 1, single buffered']
    #allocation3 [shape = 's32[1]{0}', space=sflag, size = 0x4, scoped, tag = 'scoped memory for spatial_attention_module.2']
    %9 = vsyncpa [#allocation3], 0
    // Predicated region
    $region2: #{spatial_attention_module.2} parent=1 // pred_check
      _
    $region3: #{spatial_attention_module.2} parent=1 // pred_check_branch
      %11 = sbr.rel (0) target = $region5
    $region4: #{spatial_attention_module.2} parent=1 // pred_region
      _
    $region5: #{spatial_attention_module.2} parent=1 // pred_fallthru
      _
    // Predicated region
    $region6: #{spatial_attention_module.2} parent=1 // pred_check
      _
    $region7: #{spatial_attention_module.2} parent=1 // pred_check_branch
      %13 = sbr.rel (0) target = $region9
    $region8: #{spatial_attention_module.2} parent=1 // pred_region
      %s15 = ssub.s32 16, 16
      %16 = vsyncadd [#allocation3], %s15
      %s18 = sshll.u32 %s1, 4
      %s19 = int_to_ptr.vmem [resolvable:$true] %s18
      %21 = dma.vmem_to_smem %s19, 16, [#allocation2], [#allocation3]
    $region9: #{spatial_attention_module.2} parent=1 // pred_fallthru
      _
    // Predicated region
    $region10: #{spatial_attention_module.2} parent=1 // pred_check
      _
    $region11: #{spatial_attention_module.2} parent=1 // pred_check_branch
      %23 = sbr.rel (0) target = $region13
    $region12: #{spatial_attention_module.2} parent=1 // pred_region
      %24 = dma.done [#allocation3], 16
    $region13: #{spatial_attention_module.2} parent=1 // pred_fallthru
      _
    %25 = sfence
    %p26 = scmp.eq.s32.totalorder 0, 0
    // Predicated region
    $region14: #{spatial_attention_module.2} parent=1 // pred_check
      %p27 = pneg %p26
    $region15: #{spatial_attention_module.2} parent=1 // pred_check_branch
      %29 = sbr.rel (%p27) target = $region17
    $region16: #{spatial_attention_module.2} parent=1 // pred_region
      %v30 = vlaneseq
      %vm31 = vcmp.ge.s32.totalorder %v30, 0
      %vm32 = vcmp.lt.s32.totalorder %v30, 256
      %vm33 = vmand %vm31, %vm32
      %34 = vst.msk [vmem:[%s2] sm:$0x3] %vm33, 0.0
      %35 = vst.msk [vmem:[%s3] sm:$0x3] %vm33, 0.0
    $region17: #{spatial_attention_module.2} parent=1 // pred_fallthru
      _
    %v36 = vld [vmem:[%s0] sm:$0xff]
    %v37 = vld [vmem:[%s0 + $0x8] sm:$0xff]
    %s38 = sld [smem:[#allocation2]]
    %v39 = vstv %s38
    %v40 = vmul.f32 %v36, %v39
    %v41 = vmul.f32 %v37, %v39
    %s42 = sld [smem:[#allocation2 + $0x1]]
    %v43 = vstv %s42
    %v44 = vmul.f32 %v36, %v43
    %v45 = vmul.f32 %v37, %v43
    %v48 = vrot.slane %v44, 5
    %v49 = vrot.slane %v48, 4
    %v50 = vrot.slane %v45, 5
    %v51 = vrot.slane %v50, 4
    %v54 = vadd.f32 %v40, %v49
    %v55 = vadd.f32 %v41, %v51
    %s56 = sld [smem:[#allocation2 + $0x2]]
    %v57 = vstv %s56
    %v58 = vmul.f32 %v36, %v57
    %v59 = vmul.f32 %v37, %v57
    %v62 = vrot.slane %v58, 6
    %v63 = vrot.slane %v62, 4
    %v64 = vrot.slane %v59, 6
    %v65 = vrot.slane %v64, 4
    %v68 = vadd.f32 %v54, %v63
    %v69 = vadd.f32 %v55, %v65
    %s70 = sld [smem:[#allocation2 + $0x3]]
    %v71 = vstv %s70
    %v72 = vmul.f32 %v36, %v71
    %v73 = vmul.f32 %v37, %v71
    %v76 = vrot.slane %v72, 7
    %v77 = vrot.slane %v76, 4
    %v78 = vrot.slane %v73, 7
    %v79 = vrot.slane %v78, 4
    %v82 = vadd.f32 %v68, %v77
    %v83 = vadd.f32 %v69, %v79
    %v84 = vld [vmem:[%s2] sm:$0x3]
    %v87 = vlaneseq
    %v88 = vshrl.u32 %v87, 7
    %v89 = vsub.s32 0, %v88
    %v90 = vrot.slane %v82, %v89
    %v91 = vlaneseq
    %v92 = vshrl.u32 %v91, 7
    %v93 = vsub.s32 4, %v92
    %v94 = vrot.slane %v82, %v93
    %v95 = vlaneseq
    %v96 = vshrl.u32 %v95, 7
    %v97 = vsub.s32 0, %v96
    %v98 = vrot.slane %v83, %v97
    %v99 = vlaneseq
    %v100 = vshrl.u32 %v99, 7
    %v101 = vsub.s32 4, %v100
    %v102 = vrot.slane %v83, %v101
    %vm107 = vcmask 1040384
    %v108 = vsel %vm107, %v90, 0.0
    %v109 = vsel %vm107, %v98, 0.0
    %v110 = vadd.f32 %v108, %v109
    %v111 = vsel %vm107, %v94, 0.0
    %v112 = vsel %vm107, %v102, 0.0
    %v113 = vadd.f32 %v111, %v112
    %v116 = vcombine.low %v110, %v113
    %v118 = vunpack.c.l.s4 1966171168
    %v119 = vunpack.c.0.s8 %v118
    %v120 = vlaneseq
    %v121 = vshrl.u32 %v120, 7
    %v122 = vsub.s32 %v119, %v121
    %v123 = vrot.slane %v116, %v122
    %v125 = vunpack.c.l.s4 1966171168
    %v126 = vunpack.c.0.s8 %v125
    %v127 = vlaneseq
    %v128 = vshrl.u32 %v127, 7
    %v129 = vsub.s32 %v126, %v128
    %v130 = vrot.slane %v123, %v129
    %v132 = vadd.f32 %v84, %v130
    %v133 = vlaneseq
    %vm134 = vcmp.ge.s32.totalorder %v133, 0
    %vm135 = vcmp.lt.s32.totalorder %v133, 256
    %vm136 = vmand %vm134, %vm135
    %137 = vst.msk [vmem:[%s2] sm:$0x3] %vm136, %v132
    %v138 = vld [vmem:[%s3] sm:$0x3]
    %v139 = vmul.f32 %v82, %v82
    %v140 = vmul.f32 %v83, %v83
    %v143 = vlaneseq
    %v144 = vshrl.u32 %v143, 7
    %v145 = vsub.s32 0, %v144
    %v146 = vrot.slane %v139, %v145
    %v147 = vlaneseq
    %v148 = vshrl.u32 %v147, 7
    %v149 = vsub.s32 4, %v148
    %v150 = vrot.slane %v139, %v149
    %v151 = vlaneseq
    %v152 = vshrl.u32 %v151, 7
    %v153 = vsub.s32 0, %v152
    %v154 = vrot.slane %v140, %v153
    %v155 = vlaneseq
    %v156 = vshrl.u32 %v155, 7
    %v157 = vsub.s32 4, %v156
    %v158 = vrot.slane %v140, %v157
    %v163 = vsel %vm107, %v146, 0.0
    %v164 = vsel %vm107, %v154, 0.0
    %v165 = vadd.f32 %v163, %v164
    %v166 = vsel %vm107, %v150, 0.0
    %v167 = vsel %vm107, %v158, 0.0
    %v168 = vadd.f32 %v166, %v167
    %v171 = vcombine.low %v165, %v168
    %v173 = vunpack.c.l.s4 1966171168
    %v174 = vunpack.c.0.s8 %v173
    %v175 = vlaneseq
    %v176 = vshrl.u32 %v175, 7
    %v177 = vsub.s32 %v174, %v176
    %v178 = vrot.slane %v171, %v177
    %v180 = vunpack.c.l.s4 1966171168
    %v181 = vunpack.c.0.s8 %v180
    %v182 = vlaneseq
    %v183 = vshrl.u32 %v182, 7
    %v184 = vsub.s32 %v181, %v183
    %v185 = vrot.slane %v178, %v184
    %v187 = vadd.f32 %v138, %v185
    %188 = vst.msk [vmem:[%s3] sm:$0x3] %vm136, %v187
    // Predicated region
    $region18: #{spatial_attention_module.2} parent=1 // pred_check
      _
    $region19: #{spatial_attention_module.2} parent=1 // pred_check_branch
      %190 = sbr.rel (0) target = $region21
    $region20: #{spatial_attention_module.2} parent=1 // pred_region
      _
    $region21: #{spatial_attention_module.2} parent=1 // pred_fallthru
      _
    // Predicated region
    $region22: #{spatial_attention_module.2} parent=1 // pred_check
      _
    $region23: #{spatial_attention_module.2} parent=1 // pred_check_branch
      %192 = sbr.rel (0) target = $region25
    $region24: #{spatial_attention_module.2} parent=1 // pred_region
      _
    $region25: #{spatial_attention_module.2} parent=1 // pred_fallthru
      _
    // Predicated region
    $region26: #{spatial_attention_module.2} parent=1 // pred_check
      _
    $region27: #{spatial_attention_module.2} parent=1 // pred_check_branch
      %194 = sbr.rel (0) target = $region29
    $region28: #{spatial_attention_module.2} parent=1 // pred_region
      _
    $region29: #{spatial_attention_module.2} parent=1 // pred_fallthru
      _
    // Predicated region
    $region30: #{spatial_attention_module.2} parent=1 // pred_check
      _
    $region31: #{spatial_attention_module.2} parent=1 // pred_check_branch
      %196 = sbr.rel (0) target = $region33
    $region32: #{spatial_attention_module.2} parent=1 // pred_region
      _
    $region33: #{spatial_attention_module.2} parent=1 // pred_fallthru
      _
    %197 = vsyncpa [#allocation3], 1

</llo_original>
